<compile_context>
chip_gen: v6e
topology: v6e:2x2x1
jax: 0.10.0
libtpu: 0.0.40
codegen_flags: <defaults>
</compile_context>

<pallas_src>
import functools

import jax
import jax.numpy as jnp
from jax.experimental import pallas as pl
from jax.experimental.pallas import tpu as pltpu


# ---------------------------------------------------------------------------
# Parameter prep / tiling helpers
# ---------------------------------------------------------------------------
def prepare_params(w, b, input_dim):
    """Split the fused weight [input_dim+hidden, 4*hidden] once at setup time
    and pre-cast the MXU operands to bf16 (f32 accumulate happens on-chip)."""
    wx = w[:input_dim].astype(jnp.bfloat16)      # [input_dim, 4*hidden]
    wh = w[input_dim:].astype(jnp.bfloat16)      # [hidden,    4*hidden]
    return wx, wh, b.astype(jnp.float32)


@functools.lru_cache(maxsize=1)
def _vmem_budget_bytes():
    """~75% of physical VMEM (headroom for compiler scratch); None -> default."""
    try:
        cap = pltpu.get_tpu_info().vmem_capacity_bytes
    except Exception:   # emulator / older API -> let the compiler pick
        return None
    return int(cap) * 3 // 4


def _batch_tile_cap():
    budget = _vmem_budget_bytes()
    # 128 MiB parts (v5e/v6e) can afford 1024-row tiles; 64 MiB v7x stays at 512.
    return 1024 if (budget is not None and budget >= 90 * (1 << 20)) else 512


def _choose_tile_b(B, cap):
    """Pick a batch tile that divides B, is sublane-aligned, <= cap, and (for
    large B) yields >= 2 grid tiles so both v7x TensorCores are used."""
    if B % 8 != 0:
        return B                                   # odd batch: one full block
    candidates = [t for t in range(8, min(B, cap) + 1, 8) if B % t == 0]
    if not candidates:
        return B
    if B >= 512:                                   # keep >= 2 tiles for megacore
        two_plus = [t for t in candidates if B // t >= 2]
        if two_plus:
            return max(two_plus)
    return max(candidates)


def _choose_time_chunk(T, max_tc=8):
    for tc in range(min(T, max_tc), 0, -1):
        if T % tc == 0:
            return tc
    return 1


def _const_spec(shape, buffered):
    """BlockSpec for a grid-invariant operand (weights / bias)."""
    index_map = lambda *_: (0,) * len(shape)
    if buffered:
        # Single-buffer: the block never changes, double-buffering wastes VMEM.
        return pl.BlockSpec(shape, index_map, pipeline_mode=pl.Buffered(1))
    return pl.BlockSpec(shape, index_map)


_SINGLE_BUFFER_WEIGHTS_OK = True


def _call_with_weight_buffering(build_and_call):
    """Try single-buffered weight specs first; fall back if the JAX version
    rejects pipeline_mode=pl.Buffered(1)."""
    global _SINGLE_BUFFER_WEIGHTS_OK
    if _SINGLE_BUFFER_WEIGHTS_OK:
        try:
            return build_and_call(True)
        except Exception:
            _SINGLE_BUFFER_WEIGHTS_OK = False
    return build_and_call(False)


def _nbytes(a):
    return a.size * a.dtype.itemsize


# ---------------------------------------------------------------------------
# Single-step kernel (matches PASScell_1_v2.forward exactly)
# ---------------------------------------------------------------------------
def passcell_step_kernel(x_ref, h_ref, o_ref, wx_ref, wh_ref, b_ref,
                         o_out_ref, h_out_ref):
    """One PASScell step on a [tile_b, ...] batch tile.

    x_ref:  [tb, input_dim]    wx_ref: [input_dim, 4*hidden] (bf16)
    h_ref:  [tb, hidden]       wh_ref: [hidden,    4*hidden] (bf16)
    o_ref:  [tb, hidden]       b_ref:  [1, 4*hidden] (f32)
    """
    hidden = h_ref.shape[1]

    # combined @ W == x @ Wx + h @ Wh  (no lane concat); bf16 in, f32 out.
    lin = jnp.dot(x_ref[...].astype(jnp.bfloat16),
                  wx_ref[...].astype(jnp.bfloat16),
                  preferred_element_type=jnp.float32)
    lin = lin + jnp.dot(h_ref[...].astype(jnp.bfloat16),
                        wh_ref[...].astype(jnp.bfloat16),
                        preferred_element_type=jnp.float32)
    lin = lin + b_ref[...]

    # One EUP pass over the full [tb, 4*hidden] slab, then slice the gates.
    gates = jax.nn.sigmoid(lin)
    f = gates[:, 0 * hidden:1 * hidden]
    i = gates[:, 1 * hidden:2 * hidden]
    k = gates[:, 2 * hidden:3 * hidden]
    g = gates[:, 3 * hidden:4 * hidden]          # relu(sigmoid(.)) == sigmoid(.)

    o_prev = o_ref[...].astype(jnp.float32)
    o_new = f * o_prev - i * g                   # f*o - i*relu(g)
    h_new = k * jnp.maximum(o_new, 0.0)          # k*relu(o)

    o_out_ref[...] = o_new.astype(o_out_ref.dtype)
    h_out_ref[...] = h_new.astype(h_out_ref.dtype)


def passcell_forward(x, cur_state, wx, wh, b, *, tile_b=None):
    """Single step. Returns (y, (o_new, h_new)) matching the PyTorch module.

    x: [B, input_dim]; cur_state = (o, h), each [B, hidden]
    wx: [input_dim, 4*hidden] (bf16); wh: [hidden, 4*hidden] (bf16); b: [1, 4*hidden]
    """
    o, h = cur_state
    B, input_dim = x.shape
    hidden = h.shape[1]

    if tile_b is None:
        tile_b = _choose_tile_b(B, _batch_tile_cap())
    assert B % tile_b == 0
    grid = (B // tile_b,)
    budget = _vmem_budget_bytes()

    out_sd = jax.ShapeDtypeStruct((B, hidden), x.dtype)
    flops = 2 * B * (input_dim + hidden) * 4 * hidden + 10 * B * hidden
    transc = 8 * B * hidden                       # sigmoid ~ exp + recip per elem
    bytes_accessed = (_nbytes(x) + _nbytes(h) + _nbytes(o) + _nbytes(wx)
                      + _nbytes(wh) + _nbytes(b)
                      + 2 * B * hidden * x.dtype.itemsize)

    def call(buffered):
        return pl.pallas_call(
            passcell_step_kernel,
            out_shape=(out_sd, out_sd),
            grid_spec=pltpu.PrefetchScalarGridSpec(
                num_scalar_prefetch=0,
                grid=grid,
                in_specs=[
                    pl.BlockSpec((tile_b, input_dim), lambda bi: (bi, 0)),
                    pl.BlockSpec((tile_b, hidden), lambda bi: (bi, 0)),
                    pl.BlockSpec((tile_b, hidden), lambda bi: (bi, 0)),
                    _const_spec((input_dim, 4 * hidden), buffered),
                    _const_spec((hidden, 4 * hidden), buffered),
                    _const_spec((1, 4 * hidden), buffered),
                ],
                out_specs=(
                    pl.BlockSpec((tile_b, hidden), lambda bi: (bi, 0)),
                    pl.BlockSpec((tile_b, hidden), lambda bi: (bi, 0)),
                ),
            ),
            compiler_params=pltpu.CompilerParams(
                dimension_semantics=("parallel",),
                vmem_limit_bytes=budget,
            ),
            cost_estimate=pl.CostEstimate(
                flops=flops, transcendentals=transc,
                bytes_accessed=bytes_accessed),
        )(x, h, o, wx, wh, b)

    o_new, h_new = _call_with_weight_buffering(call)
    y = o_new                      # y IS o_new (no extra DMA stream)
    return y, (o_new, h_new)


# ---------------------------------------------------------------------------
# Fused-sequence kernel: grid = (batch_tiles, T // time_chunk).
# Weights/bias stay VMEM-resident; (o, h) carried in f32 VMEM scratch.
# ---------------------------------------------------------------------------
def passcell_seq_kernel(x_ref, o0_ref, h0_ref, wx_ref, wh_ref, b_ref,
                        y_ref, h_last_ref, o_sc, h_sc):
    """Processes one (time_chunk, tile_b) block of the sequence.

    x_ref:  [tc, tb, input_dim]     wx_ref: [input_dim, 4*hidden] (bf16)
    o0/h0:  [tb, hidden]            wh_ref: [hidden,    4*hidden] (bf16)
    y_ref:  [tc, tb, hidden]        b_ref:  [1, 4*hidden]
    h_last: [tb, hidden]            o_sc/h_sc: [tb, hidden] f32 carry
    """
    t_chunk = pl.program_id(1)
    tc, tile_b, _ = x_ref.shape
    hidden = h_sc.shape[1]

    @pl.when(t_chunk == 0)
    def _init():
        o_sc[...] = o0_ref[...].astype(jnp.float32)
        h_sc[...] = h0_ref[...].astype(jnp.float32)

    # Chunk-level input projection: ONE [tc*tile_b, input_dim] matmul fills the
    # MXU M-dimension far better than tc tiny per-step matmuls (input_dim<<128).
    # The reshape only merges leading (sublane) dims -> layout-free.
    x_flat = x_ref[...].reshape(tc * tile_b, x_ref.shape[-1])
    lin_x = jnp.dot(x_flat.astype(jnp.bfloat16),
                    wx_ref[...].astype(jnp.bfloat16),
                    preferred_element_type=jnp.float32)
    lin_x = (lin_x + b_ref[...]).reshape(tc, tile_b, 4 * hidden)

    wh = wh_ref[...].astype(jnp.bfloat16)
    o = o_sc[...]
    h = h_sc[...]
    for t in range(tc):                           # static unroll over the chunk
        lin = lin_x[t] + jnp.dot(h.astype(jnp.bfloat16), wh,
                                 preferred_element_type=jnp.float32)
        gates = jax.nn.sigmoid(lin)               # relu(sigmoid(.)) == sigmoid(.)
        f = gates[:, 0 * hidden:1 * hidden]
        i = gates[:, 1 * hidden:2 * hidden]
        k = gates[:, 2 * hidden:3 * hidden]
        g = gates[:, 3 * hidden:4 * hidden]
        o = f * o - i * g
        h = k * jnp.maximum(o, 0.0)
        y_ref[t] = o.astype(y_ref.dtype)

    o_sc[...] = o
    h_sc[...] = h

    @pl.when(t_chunk == pl.num_programs(1) - 1)
    def _finalize():
        h_last_ref[...] = h.astype(h_last_ref.dtype)


def passcell_forward_sequence(x_seq, init_state, wx, wh, b, *,
                              tile_b=None, time_chunk=None):
    """Run the cell over a whole sequence inside one pallas_call.

    x_seq: [T, B, input_dim]; init_state = (o0, h0), each [B, hidden]
    Returns (y_seq [T, B, hidden], (o_T, h_T)).
    """
    o0, h0 = init_state
    T, B, input_dim = x_seq.shape
    hidden = h0.shape[1]

    if tile_b is None:
        tile_b = _choose_tile_b(B, _batch_tile_cap())
    assert B % tile_b == 0
    if time_chunk is None:
        time_chunk = _choose_time_chunk(T)
    assert T % time_chunk == 0
    grid = (B // tile_b, T // time_chunk)   # batch outer (parallel), time inner
    budget = _vmem_budget_bytes()

    y_sd = jax.ShapeDtypeStruct((T, B, hidden), x_seq.dtype)
    st_sd = jax.ShapeDtypeStruct((B, hidden), x_seq.dtype)

    flops = T * (2 * B * (input_dim + hidden) * 4 * hidden + 10 * B * hidden)
    transc = T * 8 * B * hidden
    bytes_accessed = (_nbytes(x_seq) + _nbytes(o0) + _nbytes(h0) + _nbytes(wx)
                      + _nbytes(wh) + _nbytes(b)
                      + (T + 1) * B * hidden * x_seq.dtype.itemsize)

    def call(buffered):
        return pl.pallas_call(
            passcell_seq_kernel,
            out_shape=(y_sd, st_sd),
            grid_spec=pltpu.PrefetchScalarGridSpec(
                num_scalar_prefetch=0,
                grid=grid,
                in_specs=[
                    pl.BlockSpec((time_chunk, tile_b, input_dim),
                                 lambda bi, ti: (ti, bi, 0)),
                    pl.BlockSpec((tile_b, hidden), lambda bi, ti: (bi, 0)),
                    pl.BlockSpec((tile_b, hidden), lambda bi, ti: (bi, 0)),
                    _const_spec((input_dim, 4 * hidden), buffered),
                    _const_spec((hidden, 4 * hidden), buffered),
                    _const_spec((1, 4 * hidden), buffered),
                ],
                out_specs=(
                    pl.BlockSpec((time_chunk, tile_b, hidden),
                                 lambda bi, ti: (ti, bi, 0)),
                    pl.BlockSpec((tile_b, hidden), lambda bi, ti: (bi, 0)),
                ),
                scratch_shapes=[
                    pltpu.VMEM((tile_b, hidden), jnp.float32),
                    pltpu.VMEM((tile_b, hidden), jnp.float32),
                ],
            ),
            compiler_params=pltpu.CompilerParams(
                dimension_semantics=("parallel", "arbitrary"),
                vmem_limit_bytes=budget,
            ),
            cost_estimate=pl.CostEstimate(
                flops=flops, transcendentals=transc,
                bytes_accessed=bytes_accessed),
        )(x_seq, o0, h0, wx, wh, b)

    y_seq, h_last = _call_with_weight_buffering(call)
    o_last = y_seq[-1]             # y_t == o_t, so o_T is just the last y slab
    return y_seq, (o_last, h_last)


# ---------------------------------------------------------------------------
# Pure-JAX references mirroring the PyTorch forward.
# ---------------------------------------------------------------------------
def _gates_to_state(lin, o, hidden):
    f = jax.nn.sigmoid(lin[:, 0 * hidden:1 * hidden])
    i = jax.nn.sigmoid(lin[:, 1 * hidden:2 * hidden])
    k = jax.nn.sigmoid(lin[:, 2 * hidden:3 * hidden])
    g = jax.nn.sigmoid(lin[:, 3 * hidden:4 * hidden])
    o_new = f * o - i * jax.nn.relu(g)
    h_new = k * jax.nn.relu(o_new)
    return o_new, h_new


def reference_step(x, o, h, w, b):
    """Exact module semantics (f32 weights, f32 matmul)."""
    lin = jnp.concatenate([x, h], axis=1) @ w + b[0]
    o_new, h_new = _gates_to_state(lin, o, w.shape[1] // 4)
    return o_new, (o_new, h_new)


def _bf16_round(a):
    return a.astype(jnp.bfloat16).astype(jnp.float32)


def matched_reference_step(x, o, h, w, b, input_dim):
    """Reference with operands rounded to bf16 exactly as the kernel's MXU
    sees them (f32 accumulate) -> should match the kernel very tightly."""
    wx = _bf16_round(w[:input_dim])
    wh = _bf16_round(w[input_dim:])
    lin = _bf16_round(x) @ wx + _bf16_round(h) @ wh + b[0]
    o_new, h_new = _gates_to_state(lin, o, w.shape[1] // 4)
    return o_new, (o_new, h_new)


if __name__ == "__main__":
    batch = 8
    input_dim = 4
    hidden_dim = 32     # NOTE: multiples of 128 give fully lane-dense stores
    seq_len = 8

    key = jax.random.PRNGKey(0)
    kx, ko, kh, kw, kb = jax.random.split(key, 5)

    x_seq = jax.random.normal(kx, (seq_len, batch, input_dim), jnp.float32)
    o_state = jax.random.normal(ko, (batch, hidden_dim), jnp.float32)
    h_state = jax.random.normal(kh, (batch, hidden_dim), jnp.float32)

    fan_in = input_dim + hidden_dim
    bound = 1.0 / (fan_in ** 0.5)
    w = jax.random.uniform(kw, (fan_in, 4 * hidden_dim), jnp.float32,
                           minval=-bound, maxval=bound)
    b = jax.random.uniform(kb, (1, 4 * hidden_dim), jnp.float32,
                           minval=-bound, maxval=bound)

    wx, wh, b_p = prepare_params(w, b, input_dim)

    # ---- single step (exact module.forward semantics) ----------------------
    y, (o_new, h_new) = passcell_forward(x_seq[0], (o_state, h_state),
                                         wx, wh, b_p)
    jax.block_until_ready((y, o_new, h_new))

    # Tight check vs a bf16-input-matched reference (proves the math is right).
    _, (o_m, h_m) = matched_reference_step(x_seq[0], o_state, h_state, w, b,
                                           input_dim)
    assert jnp.allclose(o_new, o_m, atol=1e-3, rtol=1e-3)
    assert jnp.allclose(h_new, h_m, atol=1e-3, rtol=1e-3)
    # Loose check vs the exact f32 module reference (bf16 MXU inputs).
    _, (o_r, h_r) = reference_step(x_seq[0], o_state, h_state, w, b)
    assert jnp.allclose(o_new, o_r, atol=5e-2, rtol=5e-2)
    assert jnp.allclose(h_new, h_r, atol=5e-2, rtol=5e-2)

    # ---- fused-sequence variant (time blocked inside the grid) -------------
    y_seq, (o_T, h_T) = passcell_forward_sequence(
        x_seq, (o_state, h_state), wx, wh, b_p)
    jax.block_until_ready((y_seq, o_T, h_T))

    o_rr, h_rr = o_state, h_state
    o_mm, h_mm = o_state, h_state
    y_m_list = []
    for t in range(seq_len):
        _, (o_rr, h_rr) = reference_step(x_seq[t], o_rr, h_rr, w, b)
        _, (o_mm, h_mm) = matched_reference_step(x_seq[t], o_mm, h_mm, w, b,
                                                 input_dim)
        y_m_list.append(o_mm)
    y_m = jnp.stack(y_m_list, axis=0)

    assert jnp.allclose(y_seq, y_m, atol=1e-3, rtol=1e-3)
    assert jnp.allclose(o_T, o_mm, atol=1e-3, rtol=1e-3)
    assert jnp.allclose(h_T, h_mm, atol=1e-3, rtol=1e-3)
    # bf16 MXU inputs compound over the recurrence -> generous tolerance here.
    assert jnp.allclose(o_T, o_rr, atol=1e-1, rtol=1e-1)
    assert jnp.allclose(h_T, h_rr, atol=1e-1, rtol=1e-1)

    print("KERNEL_OK")
</pallas_src>

<mosaic_0001>
module attributes {stable_mosaic.version = 11 : i64} {
  func.func @passcell_step_kernel(%arg0: i32, %arg1: memref<8x4xf32, #tpu.memory_space<vmem>>, %arg2: memref<8x32xf32, #tpu.memory_space<vmem>>, %arg3: memref<8x32xf32, #tpu.memory_space<vmem>>, %arg4: memref<4x128xbf16, #tpu.memory_space<vmem>>, %arg5: memref<32x128xbf16, #tpu.memory_space<vmem>>, %arg6: memref<1x128xf32, #tpu.memory_space<vmem>>, %arg7: memref<8x32xf32, #tpu.memory_space<vmem>>, %arg8: memref<8x32xf32, #tpu.memory_space<vmem>>) attributes {dimension_semantics = [#tpu.dimension_semantics<parallel>], iteration_bounds = array<i64: 1>, scalar_prefetch = 0 : i64, scratch_operands = 0 : i64, tpu.core_type = #tpu.core_type<tc>, window_params = [{transform_indices = @transform_0, window_bounds = array<i64: 8, 4>}, {transform_indices = @transform_1, window_bounds = array<i64: 8, 32>}, {transform_indices = @transform_2, window_bounds = array<i64: 8, 32>}, {pipeline_mode = #tpu.pipeline_mode<synchronous>, transform_indices = @transform_3, window_bounds = array<i64: 4, 128>}, {pipeline_mode = #tpu.pipeline_mode<synchronous>, transform_indices = @transform_4, window_bounds = array<i64: 32, 128>}, {pipeline_mode = #tpu.pipeline_mode<synchronous>, transform_indices = @transform_5, window_bounds = array<i64: 1, 128>}, {transform_indices = @transform_6, window_bounds = array<i64: 8, 32>}, {transform_indices = @transform_7, window_bounds = array<i64: 8, 32>}]} {
    %c0 = arith.constant 0 : index
    %c0_0 = arith.constant 0 : index
    %0 = vector.load %arg1[%c0, %c0_0] : memref<8x4xf32, #tpu.memory_space<vmem>>, vector<8x4xf32>
    %1 = arith.truncf %0 : vector<8x4xf32> to vector<8x4xbf16>
    %c0_1 = arith.constant 0 : index
    %c0_2 = arith.constant 0 : index
    %2 = vector.load %arg4[%c0_1, %c0_2] : memref<4x128xbf16, #tpu.memory_space<vmem>>, vector<4x128xbf16>
    %cst = arith.constant dense<0.000000e+00> : vector<8x128xf32>
    %3 = tpu.matmul %1, %2, %cst {dimension_numbers = #tpu.dot_dimension_numbers<[1], [0], [0], [1], [0, 0, 1, 1], [], []>} : vector<8x4xbf16>, vector<4x128xbf16>, vector<8x128xf32> -> vector<8x128xf32>
    %c0_3 = arith.constant 0 : index
    %c0_4 = arith.constant 0 : index
    %4 = vector.load %arg2[%c0_3, %c0_4] : memref<8x32xf32, #tpu.memory_space<vmem>>, vector<8x32xf32>
    %5 = arith.truncf %4 : vector<8x32xf32> to vector<8x32xbf16>
    %c0_5 = arith.constant 0 : index
    %c0_6 = arith.constant 0 : index
    %6 = vector.load %arg5[%c0_5, %c0_6] : memref<32x128xbf16, #tpu.memory_space<vmem>>, vector<32x128xbf16>
    %cst_7 = arith.constant dense<0.000000e+00> : vector<8x128xf32>
    %7 = tpu.matmul %5, %6, %cst_7 {dimension_numbers = #tpu.dot_dimension_numbers<[1], [0], [0], [1], [0, 0, 1, 1], [], []>} : vector<8x32xbf16>, vector<32x128xbf16>, vector<8x128xf32> -> vector<8x128xf32>
    %8 = arith.addf %3, %7 : vector<8x128xf32>
    %c0_8 = arith.constant 0 : index
    %c0_9 = arith.constant 0 : index
    %9 = vector.load %arg6[%c0_8, %c0_9] : memref<1x128xf32, #tpu.memory_space<vmem>>, vector<1x128xf32>
    %10 = vector.broadcast %9 : vector<1x128xf32> to vector<8x128xf32>
    %11 = arith.addf %8, %10 : vector<8x128xf32>
    %12 = arith.negf %11 : vector<8x128xf32>
    %13 = math.exp %12 : vector<8x128xf32>
    %cst_10 = arith.constant 1.000000e+00 : f32
    %14 = vector.broadcast %cst_10 : f32 to vector<8x128xf32>
    %15 = arith.addf %14, %13 : vector<8x128xf32>
    %16 = arith.divf %14, %15 : vector<8x128xf32>
    %17 = vector.extract_strided_slice %16 {offsets = [0, 0], sizes = [8, 32], strides = [1, 1]} : vector<8x128xf32> to vector<8x32xf32>
    %18 = vector.extract_strided_slice %16 {offsets = [0, 32], sizes = [8, 32], strides = [1, 1]} : vector<8x128xf32> to vector<8x32xf32>
    %19 = vector.extract_strided_slice %16 {offsets = [0, 64], sizes = [8, 32], strides = [1, 1]} : vector<8x128xf32> to vector<8x32xf32>
    %20 = vector.extract_strided_slice %16 {offsets = [0, 96], sizes = [8, 32], strides = [1, 1]} : vector<8x128xf32> to vector<8x32xf32>
    %c0_11 = arith.constant 0 : index
    %c0_12 = arith.constant 0 : index
    %21 = vector.load %arg3[%c0_11, %c0_12] : memref<8x32xf32, #tpu.memory_space<vmem>>, vector<8x32xf32>
    %22 = arith.mulf %17, %21 : vector<8x32xf32>
    %23 = arith.mulf %18, %20 : vector<8x32xf32>
    %24 = arith.subf %22, %23 : vector<8x32xf32>
    %cst_13 = arith.constant 0.000000e+00 : f32
    %25 = vector.broadcast %cst_13 : f32 to vector<8x32xf32>
    %26 = arith.maximumf %24, %25 : vector<8x32xf32>
    %27 = arith.mulf %19, %26 : vector<8x32xf32>
    %c0_14 = arith.constant 0 : index
    %c0_15 = arith.constant 0 : index
    %28 = vector.load %arg7[%c0_14, %c0_15] : memref<8x32xf32, #tpu.memory_space<vmem>>, vector<8x32xf32>
    tpu.vector_store %arg7[%c0_14, %c0_15], %24 {strides = array<i32>} : memref<8x32xf32, #tpu.memory_space<vmem>>, vector<8x32xf32>,
    %c0_16 = arith.constant 0 : index
    %c0_17 = arith.constant 0 : index
    %29 = vector.load %arg8[%c0_16, %c0_17] : memref<8x32xf32, #tpu.memory_space<vmem>>, vector<8x32xf32>
    tpu.vector_store %arg8[%c0_16, %c0_17], %27 {strides = array<i32>} : memref<8x32xf32, #tpu.memory_space<vmem>>, vector<8x32xf32>,
    return
  }
  func.func @transform_0(%arg0: i32) -> (i32, i32) {
    %c0_i32 = arith.constant 0 : i32
    %c0_i32_0 = arith.constant 0 : i32
    return %arg0, %c0_i32 : i32, i32
  }
  func.func @transform_1(%arg0: i32) -> (i32, i32) {
    %c0_i32 = arith.constant 0 : i32
    %c0_i32_0 = arith.constant 0 : i32
    return %arg0, %c0_i32 : i32, i32
  }
  func.func @transform_2(%arg0: i32) -> (i32, i32) {
    %c0_i32 = arith.constant 0 : i32
    %c0_i32_0 = arith.constant 0 : i32
    return %arg0, %c0_i32 : i32, i32
  }
  func.func @transform_3(%arg0: i32) -> (i32, i32) {
    %c0_i32 = arith.constant 0 : i32
    %c0_i32_0 = arith.constant 0 : i32
    %c0_i32_1 = arith.constant 0 : i32
    return %c0_i32, %c0_i32_0 : i32, i32
  }
  func.func @transform_4(%arg0: i32) -> (i32, i32) {
    %c0_i32 = arith.constant 0 : i32
    %c0_i32_0 = arith.constant 0 : i32
    %c0_i32_1 = arith.constant 0 : i32
    return %c0_i32, %c0_i32_0 : i32, i32
  }
  func.func @transform_5(%arg0: i32) -> (i32, i32) {
    %c0_i32 = arith.constant 0 : i32
    %c0_i32_0 = arith.constant 0 : i32
    %c0_i32_1 = arith.constant 0 : i32
    return %c0_i32, %c0_i32_0 : i32, i32
  }
  func.func @transform_6(%arg0: i32) -> (i32, i32) {
    %c0_i32 = arith.constant 0 : i32
    %c0_i32_0 = arith.constant 0 : i32
    return %arg0, %c0_i32 : i32, i32
  }
  func.func @transform_7(%arg0: i32) -> (i32, i32) {
    %c0_i32 = arith.constant 0 : i32
    %c0_i32_0 = arith.constant 0 : i32
    return %arg0, %c0_i32 : i32, i32
  }
}

module attributes {stable_mosaic.version = 11 : i64} {
  func.func @passcell_step_kernel(%arg0: i32, %arg1: memref<8x4xf32, #tpu.memory_space<vmem>>, %arg2: memref<8x32xf32, #tpu.memory_space<vmem>>, %arg3: memref<8x32xf32, #tpu.memory_space<vmem>>, %arg4: memref<4x128xbf16, #tpu.memory_space<vmem>>, %arg5: memref<32x128xbf16, #tpu.memory_space<vmem>>, %arg6: memref<1x128xf32, #tpu.memory_space<vmem>>, %arg7: memref<8x32xf32, #tpu.memory_space<vmem>>, %arg8: memref<8x32xf32, #tpu.memory_space<vmem>>) attributes {dimension_semantics = [#tpu.dimension_semantics<parallel>], iteration_bounds = array<i64: 1>, scalar_prefetch = 0 : i64, scratch_operands = 0 : i64, tpu.core_type = #tpu.core_type<tc>, window_params = [{transform_indices = @transform_0, window_bounds = array<i64: 8, 4>}, {transform_indices = @transform_1, window_bounds = array<i64: 8, 32>}, {transform_indices = @transform_2, window_bounds = array<i64: 8, 32>}, {pipeline_mode = #tpu.pipeline_mode<synchronous>, transform_indices = @transform_3, window_bounds = array<i64: 4, 128>}, {pipeline_mode = #tpu.pipeline_mode<synchronous>, transform_indices = @transform_4, window_bounds = array<i64: 32, 128>}, {pipeline_mode = #tpu.pipeline_mode<synchronous>, transform_indices = @transform_5, window_bounds = array<i64: 1, 128>}, {transform_indices = @transform_6, window_bounds = array<i64: 8, 32>}, {transform_indices = @transform_7, window_bounds = array<i64: 8, 32>}]} {
    %c0 = arith.constant 0 : index
    %c0_0 = arith.constant 0 : index
    %0 = vector.load %arg1[%c0, %c0_0] : memref<8x4xf32, #tpu.memory_space<vmem>>, vector<8x4xf32>
    %1 = arith.truncf %0 : vector<8x4xf32> to vector<8x4xbf16>
    %c0_1 = arith.constant 0 : index
    %c0_2 = arith.constant 0 : index
    %2 = vector.load %arg4[%c0_1, %c0_2] : memref<4x128xbf16, #tpu.memory_space<vmem>>, vector<4x128xbf16>
    %cst = arith.constant dense<0.000000e+00> : vector<8x128xf32>
    %3 = tpu.matmul %1, %2, %cst {dimension_numbers = #tpu.dot_dimension_numbers<[1], [0], [0], [1], [0, 0, 1, 1], [], []>} : vector<8x4xbf16>, vector<4x128xbf16>, vector<8x128xf32> -> vector<8x128xf32>
    %c0_3 = arith.constant 0 : index
    %c0_4 = arith.constant 0 : index
    %4 = vector.load %arg2[%c0_3, %c0_4] : memref<8x32xf32, #tpu.memory_space<vmem>>, vector<8x32xf32>
    %5 = arith.truncf %4 : vector<8x32xf32> to vector<8x32xbf16>
    %c0_5 = arith.constant 0 : index
    %c0_6 = arith.constant 0 : index
    %6 = vector.load %arg5[%c0_5, %c0_6] : memref<32x128xbf16, #tpu.memory_space<vmem>>, vector<32x128xbf16>
    %cst_7 = arith.constant dense<0.000000e+00> : vector<8x128xf32>
    %7 = tpu.matmul %5, %6, %cst_7 {dimension_numbers = #tpu.dot_dimension_numbers<[1], [0], [0], [1], [0, 0, 1, 1], [], []>} : vector<8x32xbf16>, vector<32x128xbf16>, vector<8x128xf32> -> vector<8x128xf32>
    %8 = arith.addf %3, %7 : vector<8x128xf32>
    %c0_8 = arith.constant 0 : index
    %c0_9 = arith.constant 0 : index
    %9 = vector.load %arg6[%c0_8, %c0_9] : memref<1x128xf32, #tpu.memory_space<vmem>>, vector<1x128xf32>
    %10 = vector.broadcast %9 : vector<1x128xf32> to vector<8x128xf32>
    %11 = arith.addf %8, %10 : vector<8x128xf32>
    %12 = arith.negf %11 : vector<8x128xf32>
    %13 = math.exp %12 : vector<8x128xf32>
    %cst_10 = arith.constant 1.000000e+00 : f32
    %14 = vector.broadcast %cst_10 : f32 to vector<8x128xf32>
    %15 = arith.addf %14, %13 : vector<8x128xf32>
    %16 = arith.divf %14, %15 : vector<8x128xf32>
    %17 = vector.extract_strided_slice %16 {offsets = [0, 0], sizes = [8, 32], strides = [1, 1]} : vector<8x128xf32> to vector<8x32xf32>
    %18 = vector.extract_strided_slice %16 {offsets = [0, 32], sizes = [8, 32], strides = [1, 1]} : vector<8x128xf32> to vector<8x32xf32>
    %19 = vector.extract_strided_slice %16 {offsets = [0, 64], sizes = [8, 32], strides = [1, 1]} : vector<8x128xf32> to vector<8x32xf32>
    %20 = vector.extract_strided_slice %16 {offsets = [0, 96], sizes = [8, 32], strides = [1, 1]} : vector<8x128xf32> to vector<8x32xf32>
    %c0_11 = arith.constant 0 : index
    %c0_12 = arith.constant 0 : index
    %21 = vector.load %arg3[%c0_11, %c0_12] : memref<8x32xf32, #tpu.memory_space<vmem>>, vector<8x32xf32>
    %22 = arith.mulf %17, %21 : vector<8x32xf32>
    %23 = arith.mulf %18, %20 : vector<8x32xf32>
    %24 = arith.subf %22, %23 : vector<8x32xf32>
    %cst_13 = arith.constant 0.000000e+00 : f32
    %25 = vector.broadcast %cst_13 : f32 to vector<8x32xf32>
    %26 = arith.maximumf %24, %25 : vector<8x32xf32>
    %27 = arith.mulf %19, %26 : vector<8x32xf32>
    %c0_14 = arith.constant 0 : index
    %c0_15 = arith.constant 0 : index
    %28 = vector.load %arg7[%c0_14, %c0_15] : memref<8x32xf32, #tpu.memory_space<vmem>>, vector<8x32xf32>
    tpu.vector_store %arg7[%c0_14, %c0_15], %24 {strides = array<i32>} : memref<8x32xf32, #tpu.memory_space<vmem>>, vector<8x32xf32>,
    %c0_16 = arith.constant 0 : index
    %c0_17 = arith.constant 0 : index
    %29 = vector.load %arg8[%c0_16, %c0_17] : memref<8x32xf32, #tpu.memory_space<vmem>>, vector<8x32xf32>
    tpu.vector_store %arg8[%c0_16, %c0_17], %27 {strides = array<i32>} : memref<8x32xf32, #tpu.memory_space<vmem>>, vector<8x32xf32>,
    return
  }
  func.func @transform_0(%arg0: i32) -> (i32, i32) {
    %c0_i32 = arith.constant 0 : i32
    %c0_i32_0 = arith.constant 0 : i32
    return %arg0, %c0_i32 : i32, i32
  }
  func.func @transform_1(%arg0: i32) -> (i32, i32) {
    %c0_i32 = arith.constant 0 : i32
    %c0_i32_0 = arith.constant 0 : i32
    return %arg0, %c0_i32 : i32, i32
  }
  func.func @transform_2(%arg0: i32) -> (i32, i32) {
    %c0_i32 = arith.constant 0 : i32
    %c0_i32_0 = arith.constant 0 : i32
    return %arg0, %c0_i32 : i32, i32
  }
  func.func @transform_3(%arg0: i32) -> (i32, i32) {
    %c0_i32 = arith.constant 0 : i32
    %c0_i32_0 = arith.constant 0 : i32
    %c0_i32_1 = arith.constant 0 : i32
    return %c0_i32, %c0_i32_0 : i32, i32
  }
  func.func @transform_4(%arg0: i32) -> (i32, i32) {
    %c0_i32 = arith.constant 0 : i32
    %c0_i32_0 = arith.constant 0 : i32
    %c0_i32_1 = arith.constant 0 : i32
    return %c0_i32, %c0_i32_0 : i32, i32
  }
  func.func @transform_5(%arg0: i32) -> (i32, i32) {
    %c0_i32 = arith.constant 0 : i32
    %c0_i32_0 = arith.constant 0 : i32
    %c0_i32_1 = arith.constant 0 : i32
    return %c0_i32, %c0_i32_0 : i32, i32
  }
  func.func @transform_6(%arg0: i32) -> (i32, i32) {
    %c0_i32 = arith.constant 0 : i32
    %c0_i32_0 = arith.constant 0 : i32
    return %arg0, %c0_i32 : i32, i32
  }
  func.func @transform_7(%arg0: i32) -> (i32, i32) {
    %c0_i32 = arith.constant 0 : i32
    %c0_i32_0 = arith.constant 0 : i32
    return %arg0, %c0_i32 : i32, i32
  }
}

</mosaic_0001>

<llo_original>
// kernel: tpu_custom_call.1
$region0: #{tpu_custom_call.1}
  #allocation0 [shape = 'u32[]', space=smem, size = 0x4, offset = 0x4, fixed_abs, tag = 'smem constant byte address 0x4 - core index']
  #allocation1 [shape = 'u32[144,128]{1,0:T(1,128)}', space=vmem, size = 0x12000, scoped, tag = 'internal scratch']
  %s0 = inlined_call_operand.vmem [shape: f32[8,4], index: 0, kind: input, shape index: {}]
  %s1 = inlined_call_operand.hbm [shape: f32[8,32], index: 1, kind: input, shape index: {}]
  %s2 = inlined_call_operand.hbm [shape: f32[8,32], index: 2, kind: input, shape index: {}]
  %s3 = inlined_call_operand.vmem [shape: bf16[4,128], index: 3, kind: input, shape index: {}]
  %s4 = inlined_call_operand.vmem [shape: bf16[32,128], index: 4, kind: input, shape index: {}]
  %s5 = inlined_call_operand.vmem [shape: f32[1,128], index: 5, kind: input, shape index: {}]
  %s6 = inlined_call_operand.hbm [shape: f32[8,32], index: 6, kind: output, shape index: {0}]
  %s7 = inlined_call_operand.hbm [shape: f32[8,32], index: 7, kind: output, shape index: {1}]
  %8 = xla_tuple %s6, %s7
  %s9 = sld [smem:[#allocation0]]
  $region50: #{tpu_custom_call.1} parent=0
    _
  %s11 = ssub.s32 1, %s9
  %s12 = scalar_select 0, %s11, %s9
  $region1: #{tpu_custom_call.1} parent=0
    #allocation2 [shape = 'u8[4096]{0}', space=vmem, size = 0x1000, scoped, tag = 'input window, operand 1, single buffered']
    #allocation3 [shape = 's32[1]{0}', space=sflag, size = 0x4, scoped, tag = 'scoped memory for tpu_custom_call.1']
    #allocation4 [shape = 's32[1]{0}', space=sflag, size = 0x4, scoped, tag = 'scoped memory for tpu_custom_call.1']
    #allocation5 [shape = 'u8[4096]{0}', space=vmem, size = 0x1000, scoped, tag = 'input window, operand 2, single buffered']
    #allocation6 [shape = 's32[1]{0}', space=sflag, size = 0x4, scoped, tag = 'scoped memory for tpu_custom_call.1']
    #allocation7 [shape = 'u8[4096]{0}', space=vmem, size = 0x1000, scoped, tag = 'output window, operand 0, single buffered']
    #allocation8 [shape = 'u8[4096]{0}', space=vmem, size = 0x1000, scoped, tag = 'output window, operand 1, single buffered']
    #allocation9 [shape = 's32[1]{0}', space=sflag, size = 0x4, scoped, tag = 'scoped memory for tpu_custom_call.1']
    %13 = vsyncpa [#allocation3], 0
    %14 = vsyncpa [#allocation6], 0
    %15 = vsyncpa [#allocation4], 0
    %16 = vsyncpa [#allocation9], 0
    // Predicated region
    $region2: #{tpu_custom_call.1} parent=1 // pred_check
      _
    $region3: #{tpu_custom_call.1} parent=1 // pred_check_branch
      %18 = sbr.rel (0) target = $region5
    $region4: #{tpu_custom_call.1} parent=1 // pred_region
      _
    $region5: #{tpu_custom_call.1} parent=1 // pred_fallthru
      _
    // Predicated region
    $region6: #{tpu_custom_call.1} parent=1 // pred_check
      _
    $region7: #{tpu_custom_call.1} parent=1 // pred_check_branch
      %20 = sbr.rel (0) target = $region9
    $region8: #{tpu_custom_call.1} parent=1 // pred_region
      %s22 = ssub.s32 128, 128
      %23 = vsyncadd [#allocation3], %s22
      %s25 = sshll.u32 [#allocation2], 4
      %s26 = int_to_ptr.vmem [resolvable:$true] %s25
      %28 = dma.hbm_to_vmem [thread:$0]  %s1, 128, %s26, [#allocation3]
    $region9: #{tpu_custom_call.1} parent=1 // pred_fallthru
      _
    // Predicated region
    $region10: #{tpu_custom_call.1} parent=1 // pred_check
      _
    $region11: #{tpu_custom_call.1} parent=1 // pred_check_branch
      %30 = sbr.rel (0) target = $region13
    $region12: #{tpu_custom_call.1} parent=1 // pred_region
      %s32 = ssub.s32 128, 128
      %33 = vsyncadd [#allocation6], %s32
      %s35 = sshll.u32 [#allocation5], 4
      %s36 = int_to_ptr.vmem [resolvable:$true] %s35
      %38 = dma.hbm_to_vmem [thread:$0]  %s2, 128, %s36, [#allocation6]
    $region13: #{tpu_custom_call.1} parent=1 // pred_fallthru
      _
    // Predicated region
    $region14: #{tpu_custom_call.1} parent=1 // pred_check
      _
    $region15: #{tpu_custom_call.1} parent=1 // pred_check_branch
      %40 = sbr.rel (0) target = $region17
    $region16: #{tpu_custom_call.1} parent=1 // pred_region
      _
    $region17: #{tpu_custom_call.1} parent=1 // pred_fallthru
      _
    // Predicated region
    $region18: #{tpu_custom_call.1} parent=1 // pred_check
      _
    $region19: #{tpu_custom_call.1} parent=1 // pred_check_branch
      %42 = sbr.rel (0) target = $region21
    $region20: #{tpu_custom_call.1} parent=1 // pred_region
      _
    $region21: #{tpu_custom_call.1} parent=1 // pred_fallthru
      _
    // Predicated region
    $region22: #{tpu_custom_call.1} parent=1 // pred_check
      _
    $region23: #{tpu_custom_call.1} parent=1 // pred_check_branch
      %44 = sbr.rel (0) target = $region25
    $region24: #{tpu_custom_call.1} parent=1 // pred_region
      _
    $region25: #{tpu_custom_call.1} parent=1 // pred_fallthru
      _
    // Predicated region
    $region26: #{tpu_custom_call.1} parent=1 // pred_check
      _
    $region27: #{tpu_custom_call.1} parent=1 // pred_check_branch
      %46 = sbr.rel (0) target = $region29
    $region28: #{tpu_custom_call.1} parent=1 // pred_region
      %47 = dma.done [#allocation3], 128
    $region29: #{tpu_custom_call.1} parent=1 // pred_fallthru
      _
    // Predicated region
    $region30: #{tpu_custom_call.1} parent=1 // pred_check
      _
    $region31: #{tpu_custom_call.1} parent=1 // pred_check_branch
      %49 = sbr.rel (0) target = $region33
    $region32: #{tpu_custom_call.1} parent=1 // pred_region
      %50 = dma.done [#allocation6], 128
    $region33: #{tpu_custom_call.1} parent=1 // pred_fallthru
      _
    %v52 = vld [vmem:[%s0] sm:$0xff]
    %v53 = vpack.c.bf16 %v52, %v52
    %v54 = vld [vmem:[%s3] sm:$0x3]
    %v55 = vld [vmem:[#allocation2] sm:$0xff]
    %v56 = vpack.c.bf16 %v55, %v55
    %v57 = vld [vmem:[%s4] sm:$0xf]
    %v58 = vld [vmem:[%s4 + $0x4] sm:$0xf]
    %v59 = vld [vmem:[%s4 + $0x8] sm:$0xf]
    %v60 = vld [vmem:[%s4 + $0xc] sm:$0xf]
    %v65 = vunpack.c.l.b16 %v57
    %v66 = vunpack.c.l.b16 %v58
    %v67 = vunpack.c.l.b16 %v59
    %v68 = vunpack.c.l.b16 %v60
    %v69 = vpack.c.b16 %v66, %v65
    %v70 = vpack.c.b16 %v68, %v67
    %vm73 = vcmask 261120
    %v75 = vsel %vm73, %v56, 0
    %77 = vmatprep.subr.bf16.mxu0 0
    %78 = vmatpush1.bf16.msra.mxu0 0
    %79 = vmatprep.subr.bf16.mxu0 0
    %80 = vmatpush1.bf16.msra.mxu0 0
    %81 = vmatprep.subr.bf16.mxu0 0
    %82 = vmatpush1.bf16.msra.mxu0 0
    %83 = vmatprep.subr.bf16.mxu0 0
    %84 = vmatpush1.bf16.msra.mxu0 0
    %85 = vmatprep.subr.bf16.mxu0 0
    %86 = vmatpush1.bf16.msra.mxu0 0
    %87 = vmatprep.subr.bf16.mxu0 0
    %88 = vmatpush1.bf16.msra.mxu0 0
    %89 = vmatprep.subr.bf16.mxu0 0
    %90 = vmatpush1.bf16.msra.mxu0 %v70
    %91 = vmatprep.subr.bf16.mxu0 0
    %92 = vmatpush1.bf16.msra.mxu0 %v69
    %93 = vmatprep.subr.bf16.mxu0 0
    %94 = vmatpush2.bf16.msra.mxu0 0
    %95 = vmatprep.subr.bf16.mxu0 0
    %96 = vmatpush2.bf16.msra.mxu0 0
    %97 = vmatprep.subr.bf16.mxu0 0
    %98 = vmatpush2.bf16.msra.mxu0 0
    %99 = vmatprep.subr.bf16.mxu0 0
    %100 = vmatpush2.bf16.msra.mxu0 0
    %101 = vmatprep.subr.bf16.mxu0 0
    %102 = vmatpush2.bf16.msra.mxu0 0
    %103 = vmatprep.subr.bf16.mxu0 0
    %104 = vmatpush2.bf16.msra.mxu0 0
    %105 = vmatprep.subr.bf16.mxu0 0
    %106 = vmatpush2.bf16.msra.mxu0 0
    %107 = vmatprep.subr.bf16.mxu0 0
    %108 = vmatpush2.bf16.msra.mxu0 0
    %109 = vmatprep.mubr.bf16.mxu0 0
    %110 = vmatmul.mubr.bf16.gmra.mxu0 %v75
    %v111 = vpop.f32.mrf.mxu0
    %v112 = vadd.f32 0.0, %v111
    %v113 = vpop.f32.mrf.mxu0
    %v114 = vpop.f32.mrf.mxu0
    %v115 = vpop.f32.mrf.mxu0
    %116 = vdwg.mxu0
    %vm117 = vcmask 31744
    %v119 = vsel %vm117, %v53, 0
    %vm121 = vcmask 1041408
    %v123 = vsel %vm121, %v54, 0
    %125 = vmatprep.subr.bf16.mxu0 0
    %126 = vmatpush1.bf16.msra.mxu0 0
    %127 = vmatprep.subr.bf16.mxu0 0
    %128 = vmatpush1.bf16.msra.mxu0 0
    %129 = vmatprep.subr.bf16.mxu0 0
    %130 = vmatpush1.bf16.msra.mxu0 0
    %131 = vmatprep.subr.bf16.mxu0 0
    %132 = vmatpush1.bf16.msra.mxu0 0
    %133 = vmatprep.subr.bf16.mxu0 0
    %134 = vmatpush1.bf16.msra.mxu0 0
    %135 = vmatprep.subr.bf16.mxu0 0
    %136 = vmatpush1.bf16.msra.mxu0 0
    %137 = vmatprep.subr.bf16.mxu0 0
    %138 = vmatpush1.bf16.msra.mxu0 0
    %139 = vmatprep.subr.bf16.mxu0 0
    %140 = vmatpush1.bf16.msra.mxu0 %v123
    %141 = vmatprep.subr.bf16.mxu0 0
    %142 = vmatpush2.bf16.msra.mxu0 0
    %143 = vmatprep.subr.bf16.mxu0 0
    %144 = vmatpush2.bf16.msra.mxu0 0
    %145 = vmatprep.subr.bf16.mxu0 0
    %146 = vmatpush2.bf16.msra.mxu0 0
    %147 = vmatprep.subr.bf16.mxu0 0
    %148 = vmatpush2.bf16.msra.mxu0 0
    %149 = vmatprep.subr.bf16.mxu0 0
    %150 = vmatpush2.bf16.msra.mxu0 0
    %151 = vmatprep.subr.bf16.mxu0 0
    %152 = vmatpush2.bf16.msra.mxu0 0
    %153 = vmatprep.subr.bf16.mxu0 0
    %154 = vmatpush2.bf16.msra.mxu0 0
    %155 = vmatprep.subr.bf16.mxu0 0
    %156 = vmatpush2.bf16.msra.mxu0 0
    %157 = vmatprep.mubr.bf16.mxu0 0
    %158 = vmatmul.mubr.bf16.gmra.mxu0 %v119
    %v159 = vpop.f32.mrf.mxu0
    %v160 = vadd.f32 %v112, %v159
    %v161 = vpop.f32.mrf.mxu0
    %v162 = vpop.f32.mrf.mxu0
    %v163 = vpop.f32.mrf.mxu0
    %164 = vdwg.mxu0
    %v165 = vld [vmem:[%s5] sm:$0x1]
    %v167 = vlaneseq
    %v168 = vshrl.u32 %v167, 7
    %v169 = vsub.s32 0, %v168
    %v170 = vrot.slane %v165, %v169
    %v172 = vadd.f32 %v160, %v170
    %v173 = vxor.u32 %v172, 2147483648
    %v174 = vmul.f32 %v173, 1.442695
    %v175 = vpow.pop %v174
    %v176 = vadd.f32 %v175, 1.0
    %v177 = vrcp.pop %v176
    %v178 = vmul.f32 1.0, %v177
    %v179 = vld [vmem:[#allocation5] sm:$0xff]
    %v180 = vmul.f32 %v178, %v179
    %182 = vrot.lane.b32.xlu0 %v178, 64
    %v183 = vpop.permute.xlu0 %182
    %v185 = vmul.f32 %v178, %v183
    %187 = vrot.lane.b32.xlu0 %v185, 96
    %v188 = vpop.permute.xlu0 %187
    %v190 = vsub.f32 %v180, %v188
    %v191 = vmax.f32 %v190, 0.0
    %193 = vrot.lane.b32.xlu0 %v191, 64
    %v194 = vpop.permute.xlu0 %193
    %v196 = vmul.f32 %v178, %v194
    %197 = vst.msk [vmem:[#allocation7] sm:$0xff] %vm73, %v190
    %199 = vrot.lane.b32.xlu0 %v196, 64
    %v200 = vpop.permute.xlu0 %199
    %202 = vst.msk [vmem:[#allocation8] sm:$0xff] %vm73, %v200
    // Predicated region
    $region34: #{tpu_custom_call.1} parent=1 // pred_check
      _
    $region35: #{tpu_custom_call.1} parent=1 // pred_check_branch
      %204 = sbr.rel (0) target = $region37
    $region36: #{tpu_custom_call.1} parent=1 // pred_region
      %s206 = ssub.s32 128, 128
      %207 = vsyncadd [#allocation4], %s206
      %s209 = sshll.u32 [#allocation7], 4
      %s210 = int_to_ptr.vmem [resolvable:$true] %s209
      %212 = dma.vmem_to_hbm [thread:$0]  %s210, 128, %s6, [#allocation4]
    $region37: #{tpu_custom_call.1} parent=1 // pred_fallthru
      _
    // Predicated region
    $region38: #{tpu_custom_call.1} parent=1 // pred_check
      _
    $region39: #{tpu_custom_call.1} parent=1 // pred_check_branch
      %214 = sbr.rel (0) target = $region41
    $region40: #{tpu_custom_call.1} parent=1 // pred_region
      %s216 = ssub.s32 128, 128
      %217 = vsyncadd [#allocation9], %s216
      %s219 = sshll.u32 [#allocation8], 4
      %s220 = int_to_ptr.vmem [resolvable:$true] %s219
      %222 = dma.vmem_to_hbm [thread:$0]  %s220, 128, %s7, [#allocation9]
    $region41: #{tpu_custom_call.1} parent=1 // pred_fallthru
      _
    // Predicated region
    $region42: #{tpu_custom_call.1} parent=1 // pred_check
      _
    $region43: #{tpu_custom_call.1} parent=1 // pred_check_branch
      %224 = sbr.rel (0) target = $region45
    $region44: #{tpu_custom_call.1} parent=1 // pred_region
      %225 = dma.done [#allocation4], 128
    $region45: #{tpu_custom_call.1} parent=1 // pred_fallthru
      _
    // Predicated region
    $region46: #{tpu_custom_call.1} parent=1 // pred_check
      _
    $region47: #{tpu_custom_call.1} parent=1 // pred_check_branch
      %227 = sbr.rel (0) target = $region49
    $region48: #{tpu_custom_call.1} parent=1 // pred_region
      %228 = dma.done [#allocation9], 128
    $region49: #{tpu_custom_call.1} parent=1 // pred_fallthru
      _
    %229 = vsyncpa [#allocation3], 1
    %230 = vsyncpa [#allocation6], 1
    %231 = vsyncpa [#allocation4], 1
    %232 = vsyncpa [#allocation9], 1

// kernel: tpu_custom_call.1
$region0: #{tpu_custom_call.1}
  #allocation0 [shape = 'u32[]', space=smem, size = 0x4, offset = 0x4, fixed_abs, tag = 'smem constant byte address 0x4 - core index']
  #allocation1 [shape = 'u32[144,128]{1,0:T(1,128)}', space=vmem, size = 0x12000, scoped, tag = 'internal scratch']
  %s0 = inlined_call_operand.vmem [shape: f32[8,4], index: 0, kind: input, shape index: {}]
  %s1 = inlined_call_operand.hbm [shape: f32[8,32], index: 1, kind: input, shape index: {}]
  %s2 = inlined_call_operand.hbm [shape: f32[8,32], index: 2, kind: input, shape index: {}]
  %s3 = inlined_call_operand.vmem [shape: bf16[4,128], index: 3, kind: input, shape index: {}]
  %s4 = inlined_call_operand.vmem [shape: bf16[32,128], index: 4, kind: input, shape index: {}]
  %s5 = inlined_call_operand.vmem [shape: f32[1,128], index: 5, kind: input, shape index: {}]
  %s6 = inlined_call_operand.hbm [shape: f32[8,32], index: 6, kind: output, shape index: {0}]
  %s7 = inlined_call_operand.hbm [shape: f32[8,32], index: 7, kind: output, shape index: {1}]
  %8 = xla_tuple %s6, %s7
  %s9 = sld [smem:[#allocation0]]
  $region50: #{tpu_custom_call.1} parent=0
    _
  %s11 = ssub.s32 1, %s9
  %s12 = scalar_select 0, %s11, %s9
  $region1: #{tpu_custom_call.1} parent=0
    #allocation2 [shape = 'u8[4096]{0}', space=vmem, size = 0x1000, scoped, tag = 'input window, operand 1, single buffered']
    #allocation3 [shape = 's32[1]{0}', space=sflag, size = 0x4, scoped, tag = 'scoped memory for tpu_custom_call.1']
    #allocation4 [shape = 's32[1]{0}', space=sflag, size = 0x4, scoped, tag = 'scoped memory for tpu_custom_call.1']
    #allocation5 [shape = 'u8[4096]{0}', space=vmem, size = 0x1000, scoped, tag = 'input window, operand 2, single buffered']
    #allocation6 [shape = 's32[1]{0}', space=sflag, size = 0x4, scoped, tag = 'scoped memory for tpu_custom_call.1']
    #allocation7 [shape = 'u8[4096]{0}', space=vmem, size = 0x1000, scoped, tag = 'output window, operand 0, single buffered']
    #allocation8 [shape = 'u8[4096]{0}', space=vmem, size = 0x1000, scoped, tag = 'output window, operand 1, single buffered']
    #allocation9 [shape = 's32[1]{0}', space=sflag, size = 0x4, scoped, tag = 'scoped memory for tpu_custom_call.1']
    %13 = vsyncpa [#allocation3], 0
    %14 = vsyncpa [#allocation6], 0
    %15 = vsyncpa [#allocation4], 0
    %16 = vsyncpa [#allocation9], 0
    // Predicated region
    $region2: #{tpu_custom_call.1} parent=1 // pred_check
      _
    $region3: #{tpu_custom_call.1} parent=1 // pred_check_branch
      %18 = sbr.rel (0) target = $region5
    $region4: #{tpu_custom_call.1} parent=1 // pred_region
      _
    $region5: #{tpu_custom_call.1} parent=1 // pred_fallthru
      _
    // Predicated region
    $region6: #{tpu_custom_call.1} parent=1 // pred_check
      _
    $region7: #{tpu_custom_call.1} parent=1 // pred_check_branch
      %20 = sbr.rel (0) target = $region9
    $region8: #{tpu_custom_call.1} parent=1 // pred_region
      %s22 = ssub.s32 128, 128
      %23 = vsyncadd [#allocation3], %s22
      %s25 = sshll.u32 [#allocation2], 4
      %s26 = int_to_ptr.vmem [resolvable:$true] %s25
      %28 = dma.hbm_to_vmem [thread:$0]  %s1, 128, %s26, [#allocation3]
    $region9: #{tpu_custom_call.1} parent=1 // pred_fallthru
      _
    // Predicated region
    $region10: #{tpu_custom_call.1} parent=1 // pred_check
      _
    $region11: #{tpu_custom_call.1} parent=1 // pred_check_branch
      %30 = sbr.rel (0) target = $region13
    $region12: #{tpu_custom_call.1} parent=1 // pred_region
      %s32 = ssub.s32 128, 128
      %33 = vsyncadd [#allocation6], %s32
      %s35 = sshll.u32 [#allocation5], 4
      %s36 = int_to_ptr.vmem [resolvable:$true] %s35
      %38 = dma.hbm_to_vmem [thread:$0]  %s2, 128, %s36, [#allocation6]
    $region13: #{tpu_custom_call.1} parent=1 // pred_fallthru
      _
    // Predicated region
    $region14: #{tpu_custom_call.1} parent=1 // pred_check
      _
    $region15: #{tpu_custom_call.1} parent=1 // pred_check_branch
      %40 = sbr.rel (0) target = $region17
    $region16: #{tpu_custom_call.1} parent=1 // pred_region
      _
    $region17: #{tpu_custom_call.1} parent=1 // pred_fallthru
      _
    // Predicated region
    $region18: #{tpu_custom_call.1} parent=1 // pred_check
      _
    $region19: #{tpu_custom_call.1} parent=1 // pred_check_branch
      %42 = sbr.rel (0) target = $region21
    $region20: #{tpu_custom_call.1} parent=1 // pred_region
      _
    $region21: #{tpu_custom_call.1} parent=1 // pred_fallthru
      _
    // Predicated region
    $region22: #{tpu_custom_call.1} parent=1 // pred_check
      _
    $region23: #{tpu_custom_call.1} parent=1 // pred_check_branch
      %44 = sbr.rel (0) target = $region25
    $region24: #{tpu_custom_call.1} parent=1 // pred_region
      _
    $region25: #{tpu_custom_call.1} parent=1 // pred_fallthru
      _
    // Predicated region
    $region26: #{tpu_custom_call.1} parent=1 // pred_check
      _
    $region27: #{tpu_custom_call.1} parent=1 // pred_check_branch
      %46 = sbr.rel (0) target = $region29
    $region28: #{tpu_custom_call.1} parent=1 // pred_region
      %47 = dma.done [#allocation3], 128
    $region29: #{tpu_custom_call.1} parent=1 // pred_fallthru
      _
    // Predicated region
    $region30: #{tpu_custom_call.1} parent=1 // pred_check
      _
    $region31: #{tpu_custom_call.1} parent=1 // pred_check_branch
      %49 = sbr.rel (0) target = $region33
    $region32: #{tpu_custom_call.1} parent=1 // pred_region
      %50 = dma.done [#allocation6], 128
    $region33: #{tpu_custom_call.1} parent=1 // pred_fallthru
      _
    %v52 = vld [vmem:[%s0] sm:$0xff]
    %v53 = vpack.c.bf16 %v52, %v52
    %v54 = vld [vmem:[%s3] sm:$0x3]
    %v55 = vld [vmem:[#allocation2] sm:$0xff]
    %v56 = vpack.c.bf16 %v55, %v55
    %v57 = vld [vmem:[%s4] sm:$0xf]
    %v58 = vld [vmem:[%s4 + $0x4] sm:$0xf]
    %v59 = vld [vmem:[%s4 + $0x8] sm:$0xf]
    %v60 = vld [vmem:[%s4 + $0xc] sm:$0xf]
    %v65 = vunpack.c.l.b16 %v57
    %v66 = vunpack.c.l.b16 %v58
    %v67 = vunpack.c.l.b16 %v59
    %v68 = vunpack.c.l.b16 %v60
    %v69 = vpack.c.b16 %v66, %v65
    %v70 = vpack.c.b16 %v68, %v67
    %vm73 = vcmask 261120
    %v75 = vsel %vm73, %v56, 0
    %77 = vmatprep.subr.bf16.mxu0 0
    %78 = vmatpush1.bf16.msra.mxu0 0
    %79 = vmatprep.subr.bf16.mxu0 0
    %80 = vmatpush1.bf16.msra.mxu0 0
    %81 = vmatprep.subr.bf16.mxu0 0
    %82 = vmatpush1.bf16.msra.mxu0 0
    %83 = vmatprep.subr.bf16.mxu0 0
    %84 = vmatpush1.bf16.msra.mxu0 0
    %85 = vmatprep.subr.bf16.mxu0 0
    %86 = vmatpush1.bf16.msra.mxu0 0
    %87 = vmatprep.subr.bf16.mxu0 0
    %88 = vmatpush1.bf16.msra.mxu0 0
    %89 = vmatprep.subr.bf16.mxu0 0
    %90 = vmatpush1.bf16.msra.mxu0 %v70
    %91 = vmatprep.subr.bf16.mxu0 0
    %92 = vmatpush1.bf16.msra.mxu0 %v69
    %93 = vmatprep.subr.bf16.mxu0 0
    %94 = vmatpush2.bf16.msra.mxu0 0
    %95 = vmatprep.subr.bf16.mxu0 0
    %96 = vmatpush2.bf16.msra.mxu0 0
    %97 = vmatprep.subr.bf16.mxu0 0
    %98 = vmatpush2.bf16.msra.mxu0 0
    %99 = vmatprep.subr.bf16.mxu0 0
    %100 = vmatpush2.bf16.msra.mxu0 0
    %101 = vmatprep.subr.bf16.mxu0 0
    %102 = vmatpush2.bf16.msra.mxu0 0
    %103 = vmatprep.subr.bf16.mxu0 0
    %104 = vmatpush2.bf16.msra.mxu0 0
    %105 = vmatprep.subr.bf16.mxu0 0
    %106 = vmatpush2.bf16.msra.mxu0 0
    %107 = vmatprep.subr.bf16.mxu0 0
    %108 = vmatpush2.bf16.msra.mxu0 0
    %109 = vmatprep.mubr.bf16.mxu0 0
    %110 = vmatmul.mubr.bf16.gmra.mxu0 %v75
    %v111 = vpop.f32.mrf.mxu0
    %v112 = vadd.f32 0.0, %v111
    %v113 = vpop.f32.mrf.mxu0
    %v114 = vpop.f32.mrf.mxu0
    %v115 = vpop.f32.mrf.mxu0
    %116 = vdwg.mxu0
    %vm117 = vcmask 31744
    %v119 = vsel %vm117, %v53, 0
    %vm121 = vcmask 1041408
    %v123 = vsel %vm121, %v54, 0
    %125 = vmatprep.subr.bf16.mxu0 0
    %126 = vmatpush1.bf16.msra.mxu0 0
    %127 = vmatprep.subr.bf16.mxu0 0
    %128 = vmatpush1.bf16.msra.mxu0 0
    %129 = vmatprep.subr.bf16.mxu0 0
    %130 = vmatpush1.bf16.msra.mxu0 0
    %131 = vmatprep.subr.bf16.mxu0 0
    %132 = vmatpush1.bf16.msra.mxu0 0
    %133 = vmatprep.subr.bf16.mxu0 0
    %134 = vmatpush1.bf16.msra.mxu0 0
    %135 = vmatprep.subr.bf16.mxu0 0
    %136 = vmatpush1.bf16.msra.mxu0 0
    %137 = vmatprep.subr.bf16.mxu0 0
    %138 = vmatpush1.bf16.msra.mxu0 0
    %139 = vmatprep.subr.bf16.mxu0 0
    %140 = vmatpush1.bf16.msra.mxu0 %v123
    %141 = vmatprep.subr.bf16.mxu0 0
    %142 = vmatpush2.bf16.msra.mxu0 0
    %143 = vmatprep.subr.bf16.mxu0 0
    %144 = vmatpush2.bf16.msra.mxu0 0
    %145 = vmatprep.subr.bf16.mxu0 0
    %146 = vmatpush2.bf16.msra.mxu0 0
    %147 = vmatprep.subr.bf16.mxu0 0
    %148 = vmatpush2.bf16.msra.mxu0 0
    %149 = vmatprep.subr.bf16.mxu0 0
    %150 = vmatpush2.bf16.msra.mxu0 0
    %151 = vmatprep.subr.bf16.mxu0 0
    %152 = vmatpush2.bf16.msra.mxu0 0
    %153 = vmatprep.subr.bf16.mxu0 0
    %154 = vmatpush2.bf16.msra.mxu0 0
    %155 = vmatprep.subr.bf16.mxu0 0
    %156 = vmatpush2.bf16.msra.mxu0 0
    %157 = vmatprep.mubr.bf16.mxu0 0
    %158 = vmatmul.mubr.bf16.gmra.mxu0 %v119
    %v159 = vpop.f32.mrf.mxu0
    %v160 = vadd.f32 %v112, %v159
    %v161 = vpop.f32.mrf.mxu0
    %v162 = vpop.f32.mrf.mxu0
    %v163 = vpop.f32.mrf.mxu0
    %164 = vdwg.mxu0
    %v165 = vld [vmem:[%s5] sm:$0x1]
    %v167 = vlaneseq
    %v168 = vshrl.u32 %v167, 7
    %v169 = vsub.s32 0, %v168
    %v170 = vrot.slane %v165, %v169
    %v172 = vadd.f32 %v160, %v170
    %v173 = vxor.u32 %v172, 2147483648
    %v174 = vmul.f32 %v173, 1.442695
    %v175 = vpow.pop %v174
    %v176 = vadd.f32 %v175, 1.0
    %v177 = vrcp.pop %v176
    %v178 = vmul.f32 1.0, %v177
    %v179 = vld [vmem:[#allocation5] sm:$0xff]
    %v180 = vmul.f32 %v178, %v179
    %182 = vrot.lane.b32.xlu0 %v178, 64
    %v183 = vpop.permute.xlu0 %182
    %v185 = vmul.f32 %v178, %v183
    %187 = vrot.lane.b32.xlu0 %v185, 96
    %v188 = vpop.permute.xlu0 %187
    %v190 = vsub.f32 %v180, %v188
    %v191 = vmax.f32 %v190, 0.0
    %193 = vrot.lane.b32.xlu0 %v191, 64
    %v194 = vpop.permute.xlu0 %193
    %v196 = vmul.f32 %v178, %v194
    %197 = vst.msk [vmem:[#allocation7] sm:$0xff] %vm73, %v190
    %199 = vrot.lane.b32.xlu0 %v196, 64
    %v200 = vpop.permute.xlu0 %199
    %202 = vst.msk [vmem:[#allocation8] sm:$0xff] %vm73, %v200
    // Predicated region
    $region34: #{tpu_custom_call.1} parent=1 // pred_check
      _
    $region35: #{tpu_custom_call.1} parent=1 // pred_check_branch
      %204 = sbr.rel (0) target = $region37
    $region36: #{tpu_custom_call.1} parent=1 // pred_region
      %s206 = ssub.s32 128, 128
      %207 = vsyncadd [#allocation4], %s206
      %s209 = sshll.u32 [#allocation7], 4
      %s210 = int_to_ptr.vmem [resolvable:$true] %s209
      %212 = dma.vmem_to_hbm [thread:$0]  %s210, 128, %s6, [#allocation4]
    $region37: #{tpu_custom_call.1} parent=1 // pred_fallthru
      _
    // Predicated region
    $region38: #{tpu_custom_call.1} parent=1 // pred_check
      _
    $region39: #{tpu_custom_call.1} parent=1 // pred_check_branch
      %214 = sbr.rel (0) target = $region41
    $region40: #{tpu_custom_call.1} parent=1 // pred_region
      %s216 = ssub.s32 128, 128
      %217 = vsyncadd [#allocation9], %s216
      %s219 = sshll.u32 [#allocation8], 4
      %s220 = int_to_ptr.vmem [resolvable:$true] %s219
      %222 = dma.vmem_to_hbm [thread:$0]  %s220, 128, %s7, [#allocation9]
    $region41: #{tpu_custom_call.1} parent=1 // pred_fallthru
      _
    // Predicated region
    $region42: #{tpu_custom_call.1} parent=1 // pred_check
      _
    $region43: #{tpu_custom_call.1} parent=1 // pred_check_branch
      %224 = sbr.rel (0) target = $region45
    $region44: #{tpu_custom_call.1} parent=1 // pred_region
      %225 = dma.done [#allocation4], 128
    $region45: #{tpu_custom_call.1} parent=1 // pred_fallthru
      _
    // Predicated region
    $region46: #{tpu_custom_call.1} parent=1 // pred_check
      _
    $region47: #{tpu_custom_call.1} parent=1 // pred_check_branch
      %227 = sbr.rel (0) target = $region49
    $region48: #{tpu_custom_call.1} parent=1 // pred_region
      %228 = dma.done [#allocation9], 128
    $region49: #{tpu_custom_call.1} parent=1 // pred_fallthru
      _
    %229 = vsyncpa [#allocation3], 1
    %230 = vsyncpa [#allocation6], 1
    %231 = vsyncpa [#allocation4], 1
    %232 = vsyncpa [#allocation9], 1

</llo_original>
